<compile_context>
chip_gen: v5e
topology: v5e:2x2
jax: 0.10.0
libtpu: 0.0.40
codegen_flags: <defaults>
</compile_context>

<pallas_src>
import functools

import jax
import jax.numpy as jnp
from jax.experimental import pallas as pl
from jax.experimental.pallas import tpu as pltpu


def _mlp_kernel(x_ref, w1t_ref, w2t_ref, w3t_ref, w4t_ref, bias_ref, ot_ref,
                *, compute_dtype):
    """One batch tile, computed feature-major (features on sublanes, batch on
    the 128-lane axis) so activations, VPU work and the output store are all
    lane-dense."""
    h1 = w1t_ref.shape[0]   # 2*D
    h2 = w2t_ref.shape[0]   # D
    h3 = w3t_ref.shape[0]   # D // 2
    no = w4t_ref.shape[0]   # out_dim

    # Packed per-feature bias columns (static slices of one tiny VMEM tile).
    bias = bias_ref[...]                     # (2*D, 4) float32
    b1 = bias[:h1, 0:1]
    b2 = bias[:h2, 1:2]
    b3 = bias[:h3, 2:3]
    b4 = bias[:no, 3:4]

    # (tb, D) -> (D, tb): move the batch onto the lane axis.  XLU transpose;
    # the XLU has no other work in this kernel so this is effectively free.
    xT = x_ref[...].T.astype(compute_dtype)

    # Layer 1: Linear -> ReLU                (BN1 affine folded into W2/b2)
    h = jnp.dot(w1t_ref[...], xT, preferred_element_type=jnp.float32) + b1
    h = jnp.maximum(h, 0.0)

    # Layer 2: (BN1-folded) Linear -> ReLU   (BN2 affine folded into W3/b3)
    h = jnp.dot(w2t_ref[...], h.astype(compute_dtype),
                preferred_element_type=jnp.float32) + b2
    h = jnp.maximum(h, 0.0)

    # Layer 3: (BN2-folded) Linear -> ReLU
    h = jnp.dot(w3t_ref[...], h.astype(compute_dtype),
                preferred_element_type=jnp.float32) + b3
    h = jnp.maximum(h, 0.0)

    # Layer 4: output head.  Dropout layers are identity in eval mode.
    ot_ref[...] = (jnp.dot(w4t_ref[...], h.astype(compute_dtype),
                           preferred_element_type=jnp.float32) + b4
                   ).astype(ot_ref.dtype)


def fold_params(params, *, eps=1e-5, compute_dtype=jnp.float32):
    """One-time (load-time) fold of eval-mode BatchNorm into the next Linear,
    pre-transpose of all weights for feature-major compute, and packing of the
    bias vectors into a single small (2D, 4) column array.  All fold math is
    done in f32 before any optional bf16 cast."""
    s1 = params["bn1_gamma"] / jnp.sqrt(params["bn1_rv"] + eps)
    t1 = params["bn1_beta"] - params["bn1_rm"] * s1
    s2 = params["bn2_gamma"] / jnp.sqrt(params["bn2_rv"] + eps)
    t2 = params["bn2_beta"] - params["bn2_rm"] * s2

    w1t = params["w1"].T                                  # (2D, D)
    b1 = params["b1"]
    w2t = (s1[:, None] * params["w2"]).T                  # BN1 folded, (D, 2D)
    b2 = t1 @ params["w2"] + params["b2"]
    w3t = (s2[:, None] * params["w3"]).T                  # BN2 folded, (D/2, D)
    b3 = t2 @ params["w3"] + params["b3"]
    w4t = params["w4"].T                                  # (out, D/2)
    b4 = params["b4"]

    width = max(b1.shape[0], b2.shape[0], b3.shape[0], b4.shape[0])
    pad = lambda v: jnp.pad(v, (0, width - v.shape[0]))
    bias_pack = jnp.stack([pad(b1), pad(b2), pad(b3), pad(b4)],
                          axis=1).astype(jnp.float32)     # (2D, 4)

    return {
        "w1t": w1t.astype(compute_dtype),
        "w2t": w2t.astype(compute_dtype),
        "w3t": w3t.astype(compute_dtype),
        "w4t": w4t.astype(compute_dtype),
        "bias": bias_pack,
    }


@functools.partial(jax.jit, static_argnames=("block_rows",))
def model_regv2_forward(x, folded, *, block_rows=4096):
    """x: (B, D). folded: output of fold_params. Returns (B, out_dim) f32."""
    B, D = x.shape
    out_dim = folded["w4t"].shape[0]
    compute_dtype = folded["w1t"].dtype

    # Batch tile.  block_rows is forced to a multiple of 128 so the lane-dense
    # (out_dim, tb) output block and any ragged final x tile satisfy the
    # (8, 128)-or-full-dim block rule.  If the whole batch fits in one tile we
    # take it verbatim (block == full extent is always legal), so no padding
    # or extra wrapper-side copies of x are ever made.
    block_rows = max(128, (block_rows // 128) * 128)
    if B <= block_rows:
        tb, num_tiles = B, 1
    else:
        tb = block_rows
        num_tiles = -(-B // tb)   # ragged last tile: Pallas masks OOB rows/cols

    const = lambda a: pl.BlockSpec(a.shape, lambda i: (0, 0))  # VMEM-resident

    out_t = pl.pallas_call(
        functools.partial(_mlp_kernel, compute_dtype=compute_dtype),
        out_shape=jax.ShapeDtypeStruct((out_dim, B), jnp.float32),
        grid=(num_tiles,),
        in_specs=[
            pl.BlockSpec((tb, D), lambda i: (i, 0)),   # x: streamed over batch
            const(folded["w1t"]),                      # weights: VMEM-resident
            const(folded["w2t"]),
            const(folded["w3t"]),
            const(folded["w4t"]),
            const(folded["bias"]),
        ],
        out_specs=pl.BlockSpec((out_dim, tb), lambda i: (0, i)),  # lane-dense
        compiler_params=pltpu.CompilerParams(
            dimension_semantics=("parallel",)),        # megacore on v7x
    )(x, folded["w1t"], folded["w2t"], folded["w3t"], folded["w4t"],
      folded["bias"])

    # Module semantics are (B, out_dim); the transpose touches only the tiny
    # output (32 B/row vs the 128 B/row x stream).  Callers that can consume
    # feature-major output may take `out_t` directly and skip it.
    return out_t.T


def init_params(key, input_dim, output_dim):
    d, h = input_dim, input_dim * 2
    q = input_dim // 2
    keys = jax.random.split(key, 8)

    def linear(kw, kb, fan_in, fan_out):
        bound = 1.0 / jnp.sqrt(fan_in)
        w = jax.random.uniform(kw, (fan_in, fan_out), jnp.float32, -bound, bound)
        b = jax.random.uniform(kb, (fan_out,), jnp.float32, -bound, bound)
        return w, b

    w1, b1 = linear(keys[0], keys[1], d, h)
    w2, b2 = linear(keys[2], keys[3], h, d)
    w3, b3 = linear(keys[4], keys[5], d, q)
    w4, b4 = linear(keys[6], keys[7], q, output_dim)

    return {
        "w1": w1, "b1": b1,
        "bn1_gamma": jnp.ones((h,), jnp.float32),
        "bn1_beta": jnp.zeros((h,), jnp.float32),
        "bn1_rm": jnp.zeros((h,), jnp.float32),
        "bn1_rv": jnp.ones((h,), jnp.float32),
        "w2": w2, "b2": b2,
        "bn2_gamma": jnp.ones((d,), jnp.float32),
        "bn2_beta": jnp.zeros((d,), jnp.float32),
        "bn2_rm": jnp.zeros((d,), jnp.float32),
        "bn2_rv": jnp.ones((d,), jnp.float32),
        "w3": w3, "b3": b3,
        "w4": w4, "b4": b4,
    }


def reference_forward(x, params):
    """Pure-JAX reference (same eval-mode semantics), full-precision matmuls."""
    eps = 1e-5
    hi = jax.lax.Precision.HIGHEST
    h = jnp.maximum(jnp.dot(x, params["w1"], precision=hi) + params["b1"], 0.0)
    h = (h - params["bn1_rm"]) / jnp.sqrt(params["bn1_rv"] + eps) \
        * params["bn1_gamma"] + params["bn1_beta"]
    h = jnp.maximum(jnp.dot(h, params["w2"], precision=hi) + params["b2"], 0.0)
    h = (h - params["bn2_rm"]) / jnp.sqrt(params["bn2_rv"] + eps) \
        * params["bn2_gamma"] + params["bn2_beta"]
    h = jnp.maximum(jnp.dot(h, params["w3"], precision=hi) + params["b3"], 0.0)
    return jnp.dot(h, params["w4"], precision=hi) + params["b4"]


if __name__ == "__main__":
    INPUT_DIM = 32
    OUTPUT_DIM = 8
    BATCH = 8

    key = jax.random.PRNGKey(0)
    k_x, k_p = jax.random.split(key)
    x = jax.random.normal(k_x, (BATCH, INPUT_DIM), jnp.float32)
    params = init_params(k_p, INPUT_DIM, OUTPUT_DIM)
    ref = reference_forward(x, params)

    # Default f32 path: must match the eval-mode reference tightly.
    folded = fold_params(params)                         # load-time fold/pack
    out = jax.block_until_ready(model_regv2_forward(x, folded))
    assert out.shape == (BATCH, OUTPUT_DIM)
    assert jnp.allclose(out, ref, atol=1e-3, rtol=1e-3)

    # Optional bf16 weights (x stays f32 and is cast in-kernel — no extra
    # wrapper pass over x; callers on v6e/v7x may also supply x in bf16).
    folded_bf16 = fold_params(params, compute_dtype=jnp.bfloat16)
    out_bf16 = jax.block_until_ready(model_regv2_forward(x, folded_bf16))
    assert out_bf16.shape == (BATCH, OUTPUT_DIM)
    assert jnp.allclose(out_bf16, ref, atol=5e-2, rtol=5e-2)

    print("KERNEL_OK")
</pallas_src>

<mosaic_0001>
module attributes {stable_mosaic.version = 11 : i64} {
  func.func @_mlp_kernel(%arg0: i32, %arg1: memref<8x32xf32, #tpu.memory_space<vmem>>, %arg2: memref<64x32xf32, #tpu.memory_space<vmem>>, %arg3: memref<32x64xf32, #tpu.memory_space<vmem>>, %arg4: memref<16x32xf32, #tpu.memory_space<vmem>>, %arg5: memref<8x16xf32, #tpu.memory_space<vmem>>, %arg6: memref<64x4xf32, #tpu.memory_space<vmem>>, %arg7: memref<8x8xf32, #tpu.memory_space<vmem>>) attributes {dimension_semantics = [#tpu.dimension_semantics<parallel>], iteration_bounds = array<i64: 1>, scalar_prefetch = 0 : i64, scratch_operands = 0 : i64, tpu.core_type = #tpu.core_type<tc>, window_params = [{transform_indices = @transform_0, window_bounds = array<i64: 8, 32>}, {pipeline_mode = #tpu.pipeline_mode<synchronous>, transform_indices = @transform_1, window_bounds = array<i64: 64, 32>}, {pipeline_mode = #tpu.pipeline_mode<synchronous>, transform_indices = @transform_2, window_bounds = array<i64: 32, 64>}, {pipeline_mode = #tpu.pipeline_mode<synchronous>, transform_indices = @transform_3, window_bounds = array<i64: 16, 32>}, {pipeline_mode = #tpu.pipeline_mode<synchronous>, transform_indices = @transform_4, window_bounds = array<i64: 8, 16>}, {pipeline_mode = #tpu.pipeline_mode<synchronous>, transform_indices = @transform_5, window_bounds = array<i64: 64, 4>}, {transform_indices = @transform_6, window_bounds = array<i64: 8, 8>}]} {
    %c0 = arith.constant 0 : index
    %c0_0 = arith.constant 0 : index
    %0 = vector.load %arg6[%c0, %c0_0] : memref<64x4xf32, #tpu.memory_space<vmem>>, vector<64x4xf32>
    %1 = vector.extract_strided_slice %0 {offsets = [0, 0], sizes = [64, 1], strides = [1, 1]} : vector<64x4xf32> to vector<64x1xf32>
    %2 = vector.extract_strided_slice %0 {offsets = [0, 1], sizes = [32, 1], strides = [1, 1]} : vector<64x4xf32> to vector<32x1xf32>
    %3 = vector.extract_strided_slice %0 {offsets = [0, 2], sizes = [16, 1], strides = [1, 1]} : vector<64x4xf32> to vector<16x1xf32>
    %4 = vector.extract_strided_slice %0 {offsets = [0, 3], sizes = [8, 1], strides = [1, 1]} : vector<64x4xf32> to vector<8x1xf32>
    %c0_1 = arith.constant 0 : index
    %c0_2 = arith.constant 0 : index
    %5 = vector.load %arg1[%c0_1, %c0_2] : memref<8x32xf32, #tpu.memory_space<vmem>>, vector<8x32xf32>
    %6 = tpu.transpose %5, [1, 0] : vector<8x32xf32> -> vector<32x8xf32>
    %c0_3 = arith.constant 0 : index
    %c0_4 = arith.constant 0 : index
    %7 = vector.load %arg2[%c0_3, %c0_4] : memref<64x32xf32, #tpu.memory_space<vmem>>, vector<64x32xf32>
    %cst = arith.constant dense<0.000000e+00> : vector<64x8xf32>
    %8 = tpu.matmul %7, %6, %cst {dimension_numbers = #tpu.dot_dimension_numbers<[1], [0], [0], [1], [0, 0, 1, 1], [], []>} : vector<64x32xf32>, vector<32x8xf32>, vector<64x8xf32> -> vector<64x8xf32>
    %9 = vector.broadcast %1 : vector<64x1xf32> to vector<64x8xf32>
    %10 = arith.addf %8, %9 : vector<64x8xf32>
    %cst_5 = arith.constant 0.000000e+00 : f32
    %11 = vector.broadcast %cst_5 : f32 to vector<64x8xf32>
    %12 = arith.maximumf %10, %11 : vector<64x8xf32>
    %c0_6 = arith.constant 0 : index
    %c0_7 = arith.constant 0 : index
    %13 = vector.load %arg3[%c0_6, %c0_7] : memref<32x64xf32, #tpu.memory_space<vmem>>, vector<32x64xf32>
    %cst_8 = arith.constant dense<0.000000e+00> : vector<32x8xf32>
    %14 = tpu.matmul %13, %12, %cst_8 {dimension_numbers = #tpu.dot_dimension_numbers<[1], [0], [0], [1], [0, 0, 1, 1], [], []>} : vector<32x64xf32>, vector<64x8xf32>, vector<32x8xf32> -> vector<32x8xf32>
    %15 = vector.broadcast %2 : vector<32x1xf32> to vector<32x8xf32>
    %16 = arith.addf %14, %15 : vector<32x8xf32>
    %cst_9 = arith.constant 0.000000e+00 : f32
    %17 = vector.broadcast %cst_9 : f32 to vector<32x8xf32>
    %18 = arith.maximumf %16, %17 : vector<32x8xf32>
    %c0_10 = arith.constant 0 : index
    %c0_11 = arith.constant 0 : index
    %19 = vector.load %arg4[%c0_10, %c0_11] : memref<16x32xf32, #tpu.memory_space<vmem>>, vector<16x32xf32>
    %cst_12 = arith.constant dense<0.000000e+00> : vector<16x8xf32>
    %20 = tpu.matmul %19, %18, %cst_12 {dimension_numbers = #tpu.dot_dimension_numbers<[1], [0], [0], [1], [0, 0, 1, 1], [], []>} : vector<16x32xf32>, vector<32x8xf32>, vector<16x8xf32> -> vector<16x8xf32>
    %21 = vector.broadcast %3 : vector<16x1xf32> to vector<16x8xf32>
    %22 = arith.addf %20, %21 : vector<16x8xf32>
    %cst_13 = arith.constant 0.000000e+00 : f32
    %23 = vector.broadcast %cst_13 : f32 to vector<16x8xf32>
    %24 = arith.maximumf %22, %23 : vector<16x8xf32>
    %c0_14 = arith.constant 0 : index
    %c0_15 = arith.constant 0 : index
    %25 = vector.load %arg5[%c0_14, %c0_15] : memref<8x16xf32, #tpu.memory_space<vmem>>, vector<8x16xf32>
    %cst_16 = arith.constant dense<0.000000e+00> : vector<8x8xf32>
    %26 = tpu.matmul %25, %24, %cst_16 {dimension_numbers = #tpu.dot_dimension_numbers<[1], [0], [0], [1], [0, 0, 1, 1], [], []>} : vector<8x16xf32>, vector<16x8xf32>, vector<8x8xf32> -> vector<8x8xf32>
    %27 = vector.broadcast %4 : vector<8x1xf32> to vector<8x8xf32>
    %28 = arith.addf %26, %27 : vector<8x8xf32>
    %c0_17 = arith.constant 0 : index
    %c0_18 = arith.constant 0 : index
    %29 = vector.load %arg7[%c0_17, %c0_18] : memref<8x8xf32, #tpu.memory_space<vmem>>, vector<8x8xf32>
    tpu.vector_store %arg7[%c0_17, %c0_18], %28 {strides = array<i32>} : memref<8x8xf32, #tpu.memory_space<vmem>>, vector<8x8xf32>,
    return
  }
  func.func @transform_0(%arg0: i32) -> (i32, i32) {
    %c0_i32 = arith.constant 0 : i32
    %c0_i32_0 = arith.constant 0 : i32
    return %arg0, %c0_i32 : i32, i32
  }
  func.func @transform_1(%arg0: i32) -> (i32, i32) {
    %c0_i32 = arith.constant 0 : i32
    %c0_i32_0 = arith.constant 0 : i32
    %c0_i32_1 = arith.constant 0 : i32
    return %c0_i32, %c0_i32_0 : i32, i32
  }
  func.func @transform_2(%arg0: i32) -> (i32, i32) {
    %c0_i32 = arith.constant 0 : i32
    %c0_i32_0 = arith.constant 0 : i32
    %c0_i32_1 = arith.constant 0 : i32
    return %c0_i32, %c0_i32_0 : i32, i32
  }
  func.func @transform_3(%arg0: i32) -> (i32, i32) {
    %c0_i32 = arith.constant 0 : i32
    %c0_i32_0 = arith.constant 0 : i32
    %c0_i32_1 = arith.constant 0 : i32
    return %c0_i32, %c0_i32_0 : i32, i32
  }
  func.func @transform_4(%arg0: i32) -> (i32, i32) {
    %c0_i32 = arith.constant 0 : i32
    %c0_i32_0 = arith.constant 0 : i32
    %c0_i32_1 = arith.constant 0 : i32
    return %c0_i32, %c0_i32_0 : i32, i32
  }
  func.func @transform_5(%arg0: i32) -> (i32, i32) {
    %c0_i32 = arith.constant 0 : i32
    %c0_i32_0 = arith.constant 0 : i32
    %c0_i32_1 = arith.constant 0 : i32
    return %c0_i32, %c0_i32_0 : i32, i32
  }
  func.func @transform_6(%arg0: i32) -> (i32, i32) {
    %c0_i32 = arith.constant 0 : i32
    %c0_i32_0 = arith.constant 0 : i32
    return %c0_i32, %arg0 : i32, i32
  }
}

</mosaic_0001>

<llo_original>
// kernel: model_regv2_forward.1
$region0: #{model_regv2_forward.1}
  #allocation0 [shape = 'u32[]', space=smem, size = 0x4, offset = 0x4, fixed_abs, tag = 'smem constant byte address 0x4 - core index']
  #allocation1 [shape = 'u32[72,128]{1,0:T(1,128)}', space=vmem, size = 0x9000, scoped, tag = 'internal scratch']
  %s0 = inlined_call_operand.vmem [shape: f32[8,32], index: 0, kind: input, shape index: {}]
  %s1 = inlined_call_operand.vmem [shape: f32[64,32], index: 1, kind: input, shape index: {}]
  %s2 = inlined_call_operand.vmem [shape: f32[32,64], index: 2, kind: input, shape index: {}]
  %s3 = inlined_call_operand.vmem [shape: f32[16,32], index: 3, kind: input, shape index: {}]
  %s4 = inlined_call_operand.vmem [shape: f32[8,16], index: 4, kind: input, shape index: {}]
  %s5 = inlined_call_operand.vmem [shape: f32[64,4], index: 5, kind: input, shape index: {}]
  %s6 = inlined_call_operand.vmem [shape: f32[8,8], index: 6, kind: output, shape index: {}]
  %s7 = sld [smem:[#allocation0]]
  $region34: #{model_regv2_forward.1} parent=0
    _
  %s9 = ssub.s32 1, %s7
  %s10 = scalar_select 0, %s9, %s7
  // Predicated region
  $region2: #{model_regv2_forward.1} parent=0 // pred_check
    _
  $region3: #{model_regv2_forward.1} parent=0 // pred_check_branch
    %12 = sbr.rel (0) target = $region5
  $region4: #{model_regv2_forward.1} parent=0 // pred_region
    _
  $region5: #{model_regv2_forward.1} parent=0 // pred_fallthru
    _
  // Predicated region
  $region6: #{model_regv2_forward.1} parent=0 // pred_check
    _
  $region7: #{model_regv2_forward.1} parent=0 // pred_check_branch
    %14 = sbr.rel (0) target = $region9
  $region8: #{model_regv2_forward.1} parent=0 // pred_region
    _
  $region9: #{model_regv2_forward.1} parent=0 // pred_fallthru
    _
  // Predicated region
  $region10: #{model_regv2_forward.1} parent=0 // pred_check
    _
  $region11: #{model_regv2_forward.1} parent=0 // pred_check_branch
    %16 = sbr.rel (0) target = $region13
  $region12: #{model_regv2_forward.1} parent=0 // pred_region
    _
  $region13: #{model_regv2_forward.1} parent=0 // pred_fallthru
    _
  // Predicated region
  $region14: #{model_regv2_forward.1} parent=0 // pred_check
    _
  $region15: #{model_regv2_forward.1} parent=0 // pred_check_branch
    %18 = sbr.rel (0) target = $region17
  $region16: #{model_regv2_forward.1} parent=0 // pred_region
    _
  $region17: #{model_regv2_forward.1} parent=0 // pred_fallthru
    _
  // Predicated region
  $region18: #{model_regv2_forward.1} parent=0 // pred_check
    _
  $region19: #{model_regv2_forward.1} parent=0 // pred_check_branch
    %20 = sbr.rel (0) target = $region21
  $region20: #{model_regv2_forward.1} parent=0 // pred_region
    _
  $region21: #{model_regv2_forward.1} parent=0 // pred_fallthru
    _
  // Predicated region
  $region22: #{model_regv2_forward.1} parent=0 // pred_check
    _
  $region23: #{model_regv2_forward.1} parent=0 // pred_check_branch
    %22 = sbr.rel (0) target = $region25
  $region24: #{model_regv2_forward.1} parent=0 // pred_region
    _
  $region25: #{model_regv2_forward.1} parent=0 // pred_fallthru
    _
  %v23 = vld [vmem:[%s5] sm:$0xff]
  %v24 = vld [vmem:[%s5 + $0x8] sm:$0xff]
  %v25 = vld [vmem:[%s5 + $0x10] sm:$0xff]
  %v26 = vld [vmem:[%s5 + $0x18] sm:$0xff]
  %v27 = vld [vmem:[%s5 + $0x20] sm:$0xff]
  %v28 = vld [vmem:[%s5 + $0x28] sm:$0xff]
  %v29 = vld [vmem:[%s5 + $0x30] sm:$0xff]
  %v30 = vld [vmem:[%s5 + $0x38] sm:$0xff]
  %v31 = vld [vmem:[%s0] sm:$0xff]
  %v32 = vld [vmem:[%s1] sm:$0xff]
  %v33 = vld [vmem:[%s1 + $0x8] sm:$0xff]
  %v34 = vld [vmem:[%s1 + $0x10] sm:$0xff]
  %v35 = vld [vmem:[%s1 + $0x18] sm:$0xff]
  %v36 = vld [vmem:[%s1 + $0x20] sm:$0xff]
  %v37 = vld [vmem:[%s1 + $0x28] sm:$0xff]
  %v38 = vld [vmem:[%s1 + $0x30] sm:$0xff]
  %v39 = vld [vmem:[%s1 + $0x38] sm:$0xff]
  %41 = vset.pattern.permute.xlu0 0
  %42 = vperm.xlu0 %41, %v23
  %v43 = vpop.permute.xlu0 %42
  %46 = vset.pattern.permute.xlu0 0
  %47 = vperm.xlu0 %46, %v24
  %v48 = vpop.permute.xlu0 %47
  %51 = vset.pattern.permute.xlu0 0
  %52 = vperm.xlu0 %51, %v25
  %v53 = vpop.permute.xlu0 %52
  %56 = vset.pattern.permute.xlu0 0
  %57 = vperm.xlu0 %56, %v26
  %v58 = vpop.permute.xlu0 %57
  %61 = vset.pattern.permute.xlu0 0
  %62 = vperm.xlu0 %61, %v27
  %v63 = vpop.permute.xlu0 %62
  %66 = vset.pattern.permute.xlu0 0
  %67 = vperm.xlu0 %66, %v28
  %v68 = vpop.permute.xlu0 %67
  %71 = vset.pattern.permute.xlu0 0
  %72 = vperm.xlu0 %71, %v29
  %v73 = vpop.permute.xlu0 %72
  %76 = vset.pattern.permute.xlu0 0
  %77 = vperm.xlu0 %76, %v30
  %v78 = vpop.permute.xlu0 %77
  %vm80 = vcmask 261120
  %v82 = vsel %vm80, %v32, 0
  %v85 = vsel %vm80, %v33, 0
  %v88 = vsel %vm80, %v34, 0
  %v91 = vsel %vm80, %v35, 0
  %v94 = vsel %vm80, %v36, 0
  %v97 = vsel %vm80, %v37, 0
  %v100 = vsel %vm80, %v38, 0
  %v103 = vsel %vm80, %v39, 0
  %v106 = vsel %vm80, %v31, 0
  %108 = vmatpush.xpose.msra.mxu0 0.0
  %109 = vmatpush.xpose.msra.mxu0 0.0
  %110 = vmatpush.xpose.msra.mxu0 0.0
  %111 = vmatpush.xpose.msra.mxu0 0.0
  %112 = vmatpush.xpose.msra.mxu0 0.0
  %113 = vmatpush.xpose.msra.mxu0 0.0
  %114 = vmatpush.xpose.msra.mxu0 0.0
  %115 = vmatpush.xpose.msra.mxu0 0.0
  %116 = vmatpush.xpose.msra.mxu0 0.0
  %117 = vmatpush.xpose.msra.mxu0 0.0
  %118 = vmatpush.xpose.msra.mxu0 0.0
  %119 = vmatpush.xpose.msra.mxu0 0.0
  %120 = vmatpush.xpose.msra.mxu0 0.0
  %121 = vmatpush.xpose.msra.mxu0 0.0
  %122 = vmatpush.xpose.msra.mxu0 0.0
  %123 = vmatpush.xpose.msra.mxu0 %v106
  %124 = vmatmul.f32.gmra.mxu0 %v82
  %v125 = vpop.f32.mrf.mxu0
  %v126 = vadd.f32 %v43, %v125
  %127 = vmatmul.f32.gmra.mxu0 %v85
  %v128 = vpop.f32.mrf.mxu0
  %v129 = vadd.f32 %v48, %v128
  %130 = vmatmul.f32.gmra.mxu0 %v88
  %v131 = vpop.f32.mrf.mxu0
  %v132 = vadd.f32 %v53, %v131
  %133 = vmatmul.f32.gmra.mxu0 %v91
  %v134 = vpop.f32.mrf.mxu0
  %v135 = vadd.f32 %v58, %v134
  %136 = vmatmul.f32.gmra.mxu0 %v94
  %v137 = vpop.f32.mrf.mxu0
  %v138 = vadd.f32 %v63, %v137
  %139 = vmatmul.f32.gmra.mxu0 %v97
  %v140 = vpop.f32.mrf.mxu0
  %v141 = vadd.f32 %v68, %v140
  %142 = vmatmul.f32.gmra.mxu0 %v100
  %v143 = vpop.f32.mrf.mxu0
  %v144 = vadd.f32 %v73, %v143
  %145 = vmatmul.f32.gmra.mxu0 %v103
  %v146 = vpop.f32.mrf.mxu0
  %v147 = vadd.f32 %v78, %v146
  %148 = vdwg.mxu0
  %v149 = vmax.f32 %v126, 0.0
  %v150 = vmax.f32 %v129, 0.0
  %v151 = vmax.f32 %v132, 0.0
  %v152 = vmax.f32 %v135, 0.0
  %v153 = vmax.f32 %v138, 0.0
  %v154 = vmax.f32 %v141, 0.0
  %v155 = vmax.f32 %v144, 0.0
  %v156 = vmax.f32 %v147, 0.0
  %v157 = vld [vmem:[%s2] sm:$0xff]
  %v158 = vld [vmem:[%s2 + $0x8] sm:$0xff]
  %v159 = vld [vmem:[%s2 + $0x10] sm:$0xff]
  %v160 = vld [vmem:[%s2 + $0x18] sm:$0xff]
  %161 = vset.pattern.permute.xlu0 1
  %162 = vperm.xlu0 %161, %v23
  %v163 = vpop.permute.xlu0 %162
  %165 = vset.pattern.permute.xlu0 1
  %166 = vperm.xlu0 %165, %v24
  %v167 = vpop.permute.xlu0 %166
  %169 = vset.pattern.permute.xlu0 1
  %170 = vperm.xlu0 %169, %v25
  %v171 = vpop.permute.xlu0 %170
  %173 = vset.pattern.permute.xlu0 1
  %174 = vperm.xlu0 %173, %v26
  %v175 = vpop.permute.xlu0 %174
  %vm177 = vcmask 523264
  %v179 = vsel %vm177, %v157, 0
  %v182 = vsel %vm177, %v158, 0
  %v185 = vsel %vm177, %v159, 0
  %v188 = vsel %vm177, %v160, 0
  %190 = vmatpush.msra.mxu0 0.0
  %191 = vmatpush.msra.mxu0 0.0
  %192 = vmatpush.msra.mxu0 0.0
  %193 = vmatpush.msra.mxu0 0.0
  %194 = vmatpush.msra.mxu0 0.0
  %195 = vmatpush.msra.mxu0 0.0
  %196 = vmatpush.msra.mxu0 0.0
  %197 = vmatpush.msra.mxu0 0.0
  %198 = vmatpush.msra.mxu0 %v156
  %199 = vmatpush.msra.mxu0 %v155
  %200 = vmatpush.msra.mxu0 %v154
  %201 = vmatpush.msra.mxu0 %v153
  %202 = vmatpush.msra.mxu0 %v152
  %203 = vmatpush.msra.mxu0 %v151
  %204 = vmatpush.msra.mxu0 %v150
  %205 = vmatpush.msra.mxu0 %v149
  %206 = vmatmul.f32.gmra.mxu0 %v179
  %v207 = vpop.f32.mrf.mxu0
  %v208 = vadd.f32 %v163, %v207
  %209 = vmatmul.f32.gmra.mxu0 %v182
  %v210 = vpop.f32.mrf.mxu0
  %v211 = vadd.f32 %v167, %v210
  %212 = vmatmul.f32.gmra.mxu0 %v185
  %v213 = vpop.f32.mrf.mxu0
  %v214 = vadd.f32 %v171, %v213
  %215 = vmatmul.f32.gmra.mxu0 %v188
  %v216 = vpop.f32.mrf.mxu0
  %v217 = vadd.f32 %v175, %v216
  %218 = vdwg.mxu0
  %v219 = vmax.f32 %v208, 0.0
  %v220 = vmax.f32 %v211, 0.0
  %v221 = vmax.f32 %v214, 0.0
  %v222 = vmax.f32 %v217, 0.0
  %v223 = vld [vmem:[%s3] sm:$0xff]
  %v224 = vld [vmem:[%s3 + $0x8] sm:$0xff]
  %225 = vset.pattern.permute.xlu0 2
  %226 = vperm.xlu0 %225, %v23
  %v227 = vpop.permute.xlu0 %226
  %229 = vset.pattern.permute.xlu0 2
  %230 = vperm.xlu0 %229, %v24
  %v231 = vpop.permute.xlu0 %230
  %v234 = vsel %vm80, %v223, 0
  %v237 = vsel %vm80, %v224, 0
  %239 = vmatpush.msra.mxu0 0.0
  %240 = vmatpush.msra.mxu0 0.0
  %241 = vmatpush.msra.mxu0 0.0
  %242 = vmatpush.msra.mxu0 0.0
  %243 = vmatpush.msra.mxu0 0.0
  %244 = vmatpush.msra.mxu0 0.0
  %245 = vmatpush.msra.mxu0 0.0
  %246 = vmatpush.msra.mxu0 0.0
  %247 = vmatpush.msra.mxu0 0.0
  %248 = vmatpush.msra.mxu0 0.0
  %249 = vmatpush.msra.mxu0 0.0
  %250 = vmatpush.msra.mxu0 0.0
  %251 = vmatpush.msra.mxu0 %v222
  %252 = vmatpush.msra.mxu0 %v221
  %253 = vmatpush.msra.mxu0 %v220
  %254 = vmatpush.msra.mxu0 %v219
  %255 = vmatmul.f32.gmra.mxu0 %v234
  %v256 = vpop.f32.mrf.mxu0
  %v257 = vadd.f32 %v227, %v256
  %258 = vmatmul.f32.gmra.mxu0 %v237
  %v259 = vpop.f32.mrf.mxu0
  %v260 = vadd.f32 %v231, %v259
  %261 = vdwg.mxu0
  %v262 = vmax.f32 %v257, 0.0
  %v263 = vmax.f32 %v260, 0.0
  %v264 = vld [vmem:[%s4] sm:$0xff]
  %265 = vset.pattern.permute.xlu0 3
  %266 = vperm.xlu0 %265, %v23
  %v267 = vpop.permute.xlu0 %266
  %vm269 = vcmask 130048
  %v271 = vsel %vm269, %v264, 0
  %273 = vmatpush.msra.mxu0 0.0
  %274 = vmatpush.msra.mxu0 0.0
  %275 = vmatpush.msra.mxu0 0.0
  %276 = vmatpush.msra.mxu0 0.0
  %277 = vmatpush.msra.mxu0 0.0
  %278 = vmatpush.msra.mxu0 0.0
  %279 = vmatpush.msra.mxu0 0.0
  %280 = vmatpush.msra.mxu0 0.0
  %281 = vmatpush.msra.mxu0 0.0
  %282 = vmatpush.msra.mxu0 0.0
  %283 = vmatpush.msra.mxu0 0.0
  %284 = vmatpush.msra.mxu0 0.0
  %285 = vmatpush.msra.mxu0 0.0
  %286 = vmatpush.msra.mxu0 0.0
  %287 = vmatpush.msra.mxu0 %v263
  %288 = vmatpush.msra.mxu0 %v262
  %289 = vmatmul.f32.gmra.mxu0 %v271
  %v290 = vpop.f32.mrf.mxu0
  %v291 = vadd.f32 %v267, %v290
  %292 = vdwg.mxu0
  %vm293 = vcmask 64512
  %294 = vst.msk [vmem:[%s6] sm:$0xff] %vm293, %v291
  // Predicated region
  $region26: #{model_regv2_forward.1} parent=0 // pred_check
    _
  $region27: #{model_regv2_forward.1} parent=0 // pred_check_branch
    %296 = sbr.rel (0) target = $region29
  $region28: #{model_regv2_forward.1} parent=0 // pred_region
    _
  $region29: #{model_regv2_forward.1} parent=0 // pred_fallthru
    _
  // Predicated region
  $region30: #{model_regv2_forward.1} parent=0 // pred_check
    _
  $region31: #{model_regv2_forward.1} parent=0 // pred_check_branch
    %298 = sbr.rel (0) target = $region33
  $region32: #{model_regv2_forward.1} parent=0 // pred_region
    _
  $region33: #{model_regv2_forward.1} parent=0 // pred_fallthru
    _

</llo_original>
